<compile_context>
chip_gen: v6e
topology: v6e:2x2x1
jax: 0.10.0
libtpu: 0.0.40
codegen_flags: <defaults>
</compile_context>

<pallas_src>
import functools

import jax
import jax.numpy as jnp
import numpy as np
from jax.experimental import pallas as pl
from jax.experimental.pallas import tpu as pltpu


def _cdiv(a, b):
    return -(-a // b)


def _round_up(x, m):
    return _cdiv(x, m) * m


def _state_encoder_kernel(xp_ref, w_ref, w1_ref, seg_ref, b_ref, o_ref, *,
                          H, P, use_elu, relu_param, ln_eps, ew_dtype):
    """Lane-packed fused forward.

    P consecutive logical rows live side by side on the lane axis
    (P*H == 128 for H == 32), so every intermediate is 128-lane dense.

    xp_ref : (TMP, 4*P)      f32   packed input (feature dim padded 3 -> 4)
    w_ref  : (4*H2P, H2P)    bf16  block-diagonal weight slab:
               rows [0        , HP       )        : blockdiag_P(wp0)  (HP , H2P)
               rows [H2P      , 2*H2P    )[:, :HP]: blockdiag_P(wp1)  (H2P, HP )
               rows [2*H2P    , 2*H2P+HP )        : blockdiag_P(wp2)  (HP , H2P)
               rows [3*H2P    , 4*H2P    )        : [bd(wa) | bd(wg)] (H2P, H2P)
    w1_ref : (4*P, HP)       f32   blockdiag_P(pad(w1, (4, H)))   (first linear)
    seg_ref: (HP, HP)        f32   blockdiag_P(ones(H, H) / H)    (segment-mean matrix)
    b_ref  : (8, H2P)        f32   lane-tiled biases / LayerNorm params
    o_ref  : (TMP, HP)       f32   packed output (lane-dense store)
    """
    HP = H * P
    H2P = 2 * H * P

    def act(v):
        v = v.astype(ew_dtype)
        if use_elu:
            # ELU(alpha=1).
            # TODO(synk): switch to jnp.expm1 once its Mosaic lowering is confirmed
            # (accuracy-only change near 0, ~1e-7 abs).
            return jnp.where(v > 0, v, jnp.exp(v) - 1.0)
        return jnp.where(v > 0, v, relu_param * v)            # LeakyReLU

    def mm(a, w_bf16):
        # bf16 MXU operands, f32 accumulation.
        return jnp.dot(a.astype(jnp.bfloat16), w_bf16,
                       preferred_element_type=jnp.float32)

    x = xp_ref[...]                                           # (TMP, 4P) f32

    # states0 = activation(linear1(Hist)).  The K=4P contraction stays f32 on
    # the MXU; one pass per 8 packed rows covers 8*P logical rows, and the MXU
    # has plenty of slack (EUP/HBM bound kernel), so this is effectively free.
    s0 = act(jnp.dot(x, w1_ref[...], preferred_element_type=jnp.float32)
             + b_ref[0:1, 0:HP])                              # (TMP, HP)

    # states1 = Dropout(tanh(project0(states0)))   (Dropout identity in eval)
    s1 = jnp.tanh((mm(s0, w_ref[0:HP, :]) + b_ref[1:2, :]).astype(ew_dtype))
    # states2 = Dropout(tanh(project1(states1)))
    s2 = jnp.tanh((mm(s1, w_ref[H2P:2 * H2P, 0:HP])
                   + b_ref[2:3, 0:HP]).astype(ew_dtype))      # (TMP, HP)

    # states2 = AddAndNorm(states0, states2) = LayerNorm(states0 + states2),
    # normalized over each H-lane segment.  Segmented mean/var via a tiny f32
    # block-diagonal matmul keeps the data lane-dense (no narrow relayout).
    y = s0.astype(jnp.float32) + s2.astype(jnp.float32)       # (TMP, HP) f32
    segm = seg_ref[...]
    mu = jnp.dot(y, segm, preferred_element_type=jnp.float32)         # per-lane segment mean
    d = y - mu
    var = jnp.dot(d * d, segm, preferred_element_type=jnp.float32)    # per-lane segment var
    s2n = d * jax.lax.rsqrt(var + ln_eps) * b_ref[3:4, 0:HP] + b_ref[4:5, 0:HP]

    # states3 = Dropout(activation(project2(states2)))
    s3 = act(mm(s2n, w_ref[2 * H2P:2 * H2P + HP, :]) + b_ref[5:6, :])  # (TMP, H2P)

    # GLU (dropout identity): fused [activation | gated] matmul; output lanes
    # [:HP] hold the activation path, [HP:] the gate path -> no lane shuffles.
    ag = mm(s3, w_ref[3 * H2P:4 * H2P, :]) + b_ref[6:7, :]             # (TMP, H2P)
    a_part = ag[:, 0:HP].astype(ew_dtype)
    g_part = ag[:, HP:H2P].astype(ew_dtype)
    o_ref[...] = (a_part * jax.nn.sigmoid(g_part)).astype(jnp.float32)


def _build_operands(params, H, P):
    """Build the 4 resident operands (block-diagonal / lane-tiled layouts)."""
    HP, H2P = H * P, 2 * H * P
    eye = jnp.eye(P, dtype=jnp.float32)

    def bd(w):                         # P copies of w on the block diagonal
        return jnp.kron(eye, w.astype(jnp.float32))

    def pad_to(a, shape):
        return jnp.pad(a, [(0, s - d) for d, s in zip(a.shape, shape)])

    def tile_lanes(b):                 # (1, n) -> (1, n*P)
        return jnp.tile(b, (1, P))

    # bf16 block-diagonal weight slab: 4 stacked (H2P, H2P) slots.
    w_slab = jnp.concatenate([
        pad_to(bd(params["wp0"]), (H2P, H2P)),                          # rows :HP valid
        pad_to(bd(params["wp1"]), (H2P, H2P)),                          # cols :HP valid
        pad_to(bd(params["wp2"]), (H2P, H2P)),                          # rows :HP valid
        jnp.concatenate([bd(params["wa"]), bd(params["wg"])], axis=1),  # [act | gate]
    ], axis=0).astype(jnp.bfloat16)                                     # (4*H2P, H2P)

    # f32 first-linear weight, block-diagonal, feature dim padded 3 -> 4.
    w1_bd = bd(pad_to(params["w1"], (4, H)))                            # (4P, HP)

    # Segment-mean matrix: blockdiag_P(ones(H, H)) / H.
    segm = jnp.kron(eye, jnp.ones((H, H), jnp.float32)) / H             # (HP, HP)

    rows = [
        pad_to(tile_lanes(params["b1"]), (1, H2P)),
        tile_lanes(params["bp0"]),
        pad_to(tile_lanes(params["bp1"]), (1, H2P)),
        pad_to(tile_lanes(params["ln_g"]), (1, H2P)),
        pad_to(tile_lanes(params["ln_b"]), (1, H2P)),
        tile_lanes(params["bp2"]),
        jnp.concatenate([tile_lanes(params["ba"]), tile_lanes(params["bg"])], axis=1),
        jnp.zeros((1, H2P), jnp.float32),
    ]
    b_slab = jnp.concatenate(rows, axis=0).astype(jnp.float32)          # (8, H2P)
    return w_slab, w1_bd, segm, b_slab


def _device_profile():
    """Per-generation tuning: (multi_core_grid, bf16_elementwise, tm_max, vmem_limit)."""
    try:
        kind = jax.devices()[0].device_kind.lower()
    except Exception:
        kind = ""
    if "v6" in kind:
        # v6e: 1 TC, 128 MiB physical VMEM, bf16-native VPU/EUP.
        return False, True, 8192, 64 * 1024 * 1024
    if any(v in kind for v in ("v2", "v3", "v4", "v5")):
        # v5e and older: 1 TC per Pallas core, 128 MiB VMEM, no bf16 VPU/EUP.
        return False, False, 8192, 64 * 1024 * 1024
    # v7x (and unknown/future): 2 TCs sharing 64 MiB VMEM -> conservative tile
    # and VMEM scope, keep the grid even/>=2 tiles so both cores get work.
    return True, True, 4096, 32 * 1024 * 1024


def state_encoder_pallas(hist, params, *, in_length, use_elu=True,
                         relu_param=0.01, ln_eps=1e-5, max_rows_per_tile=None):
    """StateEncoder.forward (eval mode) as one fused Pallas TPU kernel.

    hist: (B, T, 3) float32.  Returns (T - in_length + 1, B, H) float32.

    Note: projection/GLU matmuls use bf16 MXU operands (f32 accumulation) and,
    on v6e/v7x, the elementwise chain runs in bf16 -> outputs differ from a
    pure-f32 PyTorch forward at roughly the 1e-3 level.
    """
    B, T, F = hist.shape
    assert F == 3, "StateEncoder.linear1 expects 3 input features"
    H = params["w1"].shape[1]

    # Hist.permute(1, 0, 2)[in_length - 1:]
    x = jnp.transpose(hist, (1, 0, 2))[in_length - 1:]        # (T', B, 3)
    Tp = x.shape[0]
    assert Tp >= 1, "in_length must be <= T"
    N = Tp * B

    # Lane packing factor: P consecutive rows side by side so P*H fills the
    # 128-lane vreg (P=4 for H=32).  Falls back to P=1 for awkward H.
    P = 128 // H if (H <= 128 and 128 % H == 0) else 1

    multi_core, bf16_ew, tm_max, vmem_limit = _device_profile()
    if max_rows_per_tile is not None:
        tm_max = max_rows_per_tile
    ew_dtype = jnp.bfloat16 if bf16_ew else jnp.float32

    # Tile selection: as few / as large tiles as the VMEM budget allows
    # (amortizes the ~0.35us/step grid overhead), even >=2-tile grid on v7x
    # so both TensorCores work, minimal padding waste, TM a multiple of 8*P
    # (>=16) for clean sublane/bf16 packing.
    row_mult = max(8 * P, 16)
    nt = max(1, _cdiv(N, tm_max))
    if multi_core and N >= 256:
        nt = max(nt, 2)
        nt += nt % 2
    TM = _round_up(_cdiv(N, nt), row_mult)                    # logical rows per tile
    Np = nt * TM
    TMP = TM // P                                             # packed rows per tile

    # Pack: pad feature dim 3 -> 4, pad rows, fold P rows into the lane axis
    # (row-major reshape: free in HBM).
    xf = x.reshape(N, F).astype(jnp.float32)
    xf = jnp.pad(xf, ((0, Np - N), (0, 4 - F)))               # (Np, 4)
    xp = xf.reshape(Np // P, 4 * P)                           # (Np/P, 4P)

    w_slab, w1_bd, segm, b_slab = _build_operands(params, H, P)

    kernel = functools.partial(_state_encoder_kernel, H=H, P=P, use_elu=use_elu,
                               relu_param=relu_param, ln_eps=ln_eps,
                               ew_dtype=ew_dtype)

    HP = H * P
    out = pl.pallas_call(
        kernel,
        out_shape=jax.ShapeDtypeStruct((Np // P, HP), jnp.float32),
        grid=(nt,),
        in_specs=[
            pl.BlockSpec((TMP, 4 * P), lambda i: (i, 0)),
            pl.BlockSpec(w_slab.shape, lambda i: (0, 0)),     # resident weight slab
            pl.BlockSpec(w1_bd.shape, lambda i: (0, 0)),      # resident first-linear W
            pl.BlockSpec(segm.shape, lambda i: (0, 0)),       # resident LN segment matrix
            pl.BlockSpec(b_slab.shape, lambda i: (0, 0)),     # resident biases / LN params
        ],
        out_specs=pl.BlockSpec((TMP, HP), lambda i: (i, 0)),  # lane-dense (128-wide) store
        compiler_params=pltpu.CompilerParams(
            dimension_semantics=("parallel",),
            vmem_limit_bytes=vmem_limit),
    )(xp, w_slab, w1_bd, segm, b_slab)

    # Undo packing + padding (row-major reshapes, free in HBM).
    return out.reshape(Np, H)[:N].reshape(Tp, B, H)


def init_params(key, H):
    """Deterministic synthetic parameters matching the PyTorch module shapes.

    PyTorch nn.Linear(in, out) has W: (out, in); we store W transposed
    (in, out) so the kernel does x @ W.  Biases are kept 2-D (1, out).
    """
    def linear(k, n_in, n_out):
        kw, kb = jax.random.split(k)
        bound = 1.0 / np.sqrt(n_in)
        w = jax.random.uniform(kw, (n_in, n_out), jnp.float32, -bound, bound)
        b = jax.random.uniform(kb, (1, n_out), jnp.float32, -bound, bound)
        return w, b

    ks = jax.random.split(key, 8)
    w1, b1 = linear(ks[0], 3, H)            # linear1: 3 -> H
    wp0, bp0 = linear(ks[1], H, 2 * H)      # project0
    wp1, bp1 = linear(ks[2], 2 * H, H)      # project1
    wp2, bp2 = linear(ks[3], H, 2 * H)      # project2
    wa, ba = linear(ks[4], 2 * H, H)        # GLU activation_layer
    wg, bg = linear(ks[5], 2 * H, H)        # GLU gated_layer
    ln_g = jnp.ones((1, H), jnp.float32)    # LayerNorm weight (PyTorch default)
    ln_b = jnp.zeros((1, H), jnp.float32)   # LayerNorm bias
    return dict(w1=w1, b1=b1, wp0=wp0, bp0=bp0, wp1=wp1, bp1=bp1,
                ln_g=ln_g, ln_b=ln_b, wp2=wp2, bp2=bp2,
                wa=wa, ba=ba, wg=wg, bg=bg)


def state_encoder_ref(hist, params, *, in_length, use_elu=True, relu_param=0.01,
                      ln_eps=1e-5, matmul_dtype=jnp.float32, ew_dtype=jnp.float32):
    """Pure-JAX reference of the PyTorch forward (eval mode: Dropout = identity).

    matmul_dtype=bf16 / ew_dtype=bf16 reproduce the kernel's MXU-operand and
    (v6e/v7x) elementwise precision; the defaults give PyTorch f32 semantics.
    """
    def act(v):
        v = v.astype(ew_dtype)
        return jnp.where(v > 0, v, jnp.exp(v) - 1.0) if use_elu \
            else jnp.where(v > 0, v, relu_param * v)

    def mm(a, w):
        return jnp.dot(a.astype(matmul_dtype), w.astype(matmul_dtype),
                       preferred_element_type=jnp.float32)

    x = jnp.transpose(hist, (1, 0, 2))[in_length - 1:]
    # First linear stays f32 in the kernel as well.
    s0 = act(jnp.dot(x, params["w1"], preferred_element_type=jnp.float32)
             + params["b1"][0])
    s1 = jnp.tanh((mm(s0, params["wp0"]) + params["bp0"][0]).astype(ew_dtype))
    s2 = jnp.tanh((mm(s1, params["wp1"]) + params["bp1"][0]).astype(ew_dtype))
    y = s0.astype(jnp.float32) + s2.astype(jnp.float32)
    mu = jnp.mean(y, -1, keepdims=True)
    var = jnp.mean((y - mu) ** 2, -1, keepdims=True)
    s2n = (y - mu) / jnp.sqrt(var + ln_eps) * params["ln_g"][0] + params["ln_b"][0]
    s3 = act(mm(s2n, params["wp2"]) + params["bp2"][0])
    a = (mm(s3, params["wa"]) + params["ba"][0]).astype(ew_dtype)
    g = jax.nn.sigmoid((mm(s3, params["wg"]) + params["bg"][0]).astype(ew_dtype))
    return (a * g).astype(jnp.float32)


if __name__ == "__main__":
    key = jax.random.PRNGKey(0)
    k_hist, k_hist2, k_params = jax.random.split(key, 3)

    # Small shapes consistent with the module:
    #   Hist: (batch=16, in_length=8, 3); lstm_encoder_size = traj_linear_hidden = 32
    B, T, F = 16, 8, 3
    in_length = 8
    H = 32

    hist = jax.random.normal(k_hist, (B, T, F), jnp.float32)
    params = init_params(k_params, H)

    out = state_encoder_pallas(hist, params, in_length=in_length, use_elu=True)
    jax.block_until_ready(out)
    assert out.shape == (T - in_length + 1, B, H)

    _, bf16_ew, _, _ = _device_profile()
    ew = jnp.bfloat16 if bf16_ew else jnp.float32
    tol = 5e-2 if bf16_ew else 3e-2

    # Check 1: numerics-matched reference (same MXU-operand / elementwise precision).
    ref_m = state_encoder_ref(hist, params, in_length=in_length, use_elu=True,
                              matmul_dtype=jnp.bfloat16, ew_dtype=ew)
    np.testing.assert_allclose(np.asarray(out), np.asarray(ref_m),
                               rtol=1e-2, atol=1e-2)

    # Check 2: full-f32 PyTorch-semantics reference (looser: bf16 MXU operands,
    # bf16 elementwise on v6e/v7x).
    ref_f32 = state_encoder_ref(hist, params, in_length=in_length, use_elu=True)
    np.testing.assert_allclose(np.asarray(out), np.asarray(ref_f32),
                               rtol=tol, atol=tol)

    # Check 3: multi-tile grid + row padding + LeakyReLU branch.
    B2, T2, il2 = 13, 12, 8
    hist2 = jax.random.normal(k_hist2, (B2, T2, F), jnp.float32)
    out2 = state_encoder_pallas(hist2, params, in_length=il2, use_elu=False,
                                max_rows_per_tile=64)
    jax.block_until_ready(out2)
    ref2 = state_encoder_ref(hist2, params, in_length=il2, use_elu=False)
    np.testing.assert_allclose(np.asarray(out2), np.asarray(ref2),
                               rtol=tol, atol=tol)

    print("KERNEL_OK")
</pallas_src>

<mosaic_0001>
module attributes {stable_mosaic.version = 11 : i64} {
  func.func @_state_encoder_kernel(%arg0: i32, %arg1: memref<8x16xf32, #tpu.memory_space<vmem>>, %arg2: memref<1024x256xbf16, #tpu.memory_space<vmem>>, %arg3: memref<16x128xf32, #tpu.memory_space<vmem>>, %arg4: memref<128x128xf32, #tpu.memory_space<vmem>>, %arg5: memref<8x256xf32, #tpu.memory_space<vmem>>, %arg6: memref<8x128xf32, #tpu.memory_space<vmem>>) attributes {dimension_semantics = [#tpu.dimension_semantics<parallel>], iteration_bounds = array<i64: 1>, scalar_prefetch = 0 : i64, scratch_operands = 0 : i64, tpu.core_type = #tpu.core_type<tc>, window_params = [{transform_indices = @transform_0, window_bounds = array<i64: 8, 16>}, {pipeline_mode = #tpu.pipeline_mode<synchronous>, transform_indices = @transform_1, window_bounds = array<i64: 1024, 256>}, {pipeline_mode = #tpu.pipeline_mode<synchronous>, transform_indices = @transform_2, window_bounds = array<i64: 16, 128>}, {pipeline_mode = #tpu.pipeline_mode<synchronous>, transform_indices = @transform_3, window_bounds = array<i64: 128, 128>}, {pipeline_mode = #tpu.pipeline_mode<synchronous>, transform_indices = @transform_4, window_bounds = array<i64: 8, 256>}, {transform_indices = @transform_5, window_bounds = array<i64: 8, 128>}]} {
    %c0 = arith.constant 0 : index
    %c0_0 = arith.constant 0 : index
    %0 = vector.load %arg1[%c0, %c0_0] : memref<8x16xf32, #tpu.memory_space<vmem>>, vector<8x16xf32>
    %c0_1 = arith.constant 0 : index
    %c0_2 = arith.constant 0 : index
    %1 = vector.load %arg3[%c0_1, %c0_2] : memref<16x128xf32, #tpu.memory_space<vmem>>, vector<16x128xf32>
    %cst = arith.constant dense<0.000000e+00> : vector<8x128xf32>
    %2 = tpu.matmul %0, %1, %cst {dimension_numbers = #tpu.dot_dimension_numbers<[1], [0], [0], [1], [0, 0, 1, 1], [], []>} : vector<8x16xf32>, vector<16x128xf32>, vector<8x128xf32> -> vector<8x128xf32>
    %c0_3 = arith.constant 0 : index
    %c0_4 = arith.constant 0 : index
    %3 = vector.load %arg5[%c0_3, %c0_4] : memref<8x256xf32, #tpu.memory_space<vmem>>, vector<1x128xf32>
    %4 = vector.broadcast %3 : vector<1x128xf32> to vector<8x128xf32>
    %5 = arith.addf %2, %4 : vector<8x128xf32>
    %6 = arith.truncf %5 : vector<8x128xf32> to vector<8x128xbf16>
    %cst_5 = arith.constant 0.000000e+00 : bf16
    %7 = vector.broadcast %cst_5 : bf16 to vector<8x128xbf16>
    %8 = arith.cmpf ogt, %6, %7 : vector<8x128xbf16>
    %9 = math.exp %6 : vector<8x128xbf16>
    %cst_6 = arith.constant 1.000000e+00 : bf16
    %10 = vector.broadcast %cst_6 : bf16 to vector<8x128xbf16>
    %11 = arith.subf %9, %10 : vector<8x128xbf16>
    %12 = arith.select %8, %6, %11 : vector<8x128xi1>, vector<8x128xbf16>
    %c0_7 = arith.constant 0 : index
    %c0_8 = arith.constant 0 : index
    %13 = vector.load %arg2[%c0_7, %c0_8] : memref<1024x256xbf16, #tpu.memory_space<vmem>>, vector<128x256xbf16>
    %cst_9 = arith.constant dense<0.000000e+00> : vector<8x256xf32>
    %14 = tpu.matmul %12, %13, %cst_9 {dimension_numbers = #tpu.dot_dimension_numbers<[1], [0], [0], [1], [0, 0, 1, 1], [], []>} : vector<8x128xbf16>, vector<128x256xbf16>, vector<8x256xf32> -> vector<8x256xf32>
    %c1 = arith.constant 1 : index
    %c0_10 = arith.constant 0 : index
    %15 = vector.load %arg5[%c1, %c0_10] : memref<8x256xf32, #tpu.memory_space<vmem>>, vector<1x256xf32>
    %16 = vector.broadcast %15 : vector<1x256xf32> to vector<8x256xf32>
    %17 = arith.addf %14, %16 : vector<8x256xf32>
    %18 = arith.truncf %17 : vector<8x256xf32> to vector<8x256xbf16>
    %19 = math.tanh %18 : vector<8x256xbf16>
    %c256 = arith.constant 256 : index
    %c0_11 = arith.constant 0 : index
    %20 = vector.load %arg2[%c256, %c0_11] : memref<1024x256xbf16, #tpu.memory_space<vmem>>, vector<256x128xbf16>
    %cst_12 = arith.constant dense<0.000000e+00> : vector<8x128xf32>
    %21 = tpu.matmul %19, %20, %cst_12 {dimension_numbers = #tpu.dot_dimension_numbers<[1], [0], [0], [1], [0, 0, 1, 1], [], []>} : vector<8x256xbf16>, vector<256x128xbf16>, vector<8x128xf32> -> vector<8x128xf32>
    %c2 = arith.constant 2 : index
    %c0_13 = arith.constant 0 : index
    %22 = vector.load %arg5[%c2, %c0_13] : memref<8x256xf32, #tpu.memory_space<vmem>>, vector<1x128xf32>
    %23 = vector.broadcast %22 : vector<1x128xf32> to vector<8x128xf32>
    %24 = arith.addf %21, %23 : vector<8x128xf32>
    %25 = arith.truncf %24 : vector<8x128xf32> to vector<8x128xbf16>
    %26 = math.tanh %25 : vector<8x128xbf16>
    %27 = arith.extf %12 : vector<8x128xbf16> to vector<8x128xf32>
    %28 = arith.extf %26 : vector<8x128xbf16> to vector<8x128xf32>
    %29 = arith.addf %27, %28 : vector<8x128xf32>
    %c0_14 = arith.constant 0 : index
    %c0_15 = arith.constant 0 : index
    %30 = vector.load %arg4[%c0_14, %c0_15] : memref<128x128xf32, #tpu.memory_space<vmem>>, vector<128x128xf32>
    %cst_16 = arith.constant dense<0.000000e+00> : vector<8x128xf32>
    %31 = tpu.matmul %29, %30, %cst_16 {dimension_numbers = #tpu.dot_dimension_numbers<[1], [0], [0], [1], [0, 0, 1, 1], [], []>} : vector<8x128xf32>, vector<128x128xf32>, vector<8x128xf32> -> vector<8x128xf32>
    %32 = arith.subf %29, %31 : vector<8x128xf32>
    %33 = arith.mulf %32, %32 : vector<8x128xf32>
    %cst_17 = arith.constant dense<0.000000e+00> : vector<8x128xf32>
    %34 = tpu.matmul %33, %30, %cst_17 {dimension_numbers = #tpu.dot_dimension_numbers<[1], [0], [0], [1], [0, 0, 1, 1], [], []>} : vector<8x128xf32>, vector<128x128xf32>, vector<8x128xf32> -> vector<8x128xf32>
    %cst_18 = arith.constant 9.99999974E-6 : f32
    %35 = vector.broadcast %cst_18 : f32 to vector<8x128xf32>
    %36 = arith.addf %34, %35 : vector<8x128xf32>
    %37 = math.rsqrt %36 : vector<8x128xf32>
    %38 = arith.mulf %32, %37 : vector<8x128xf32>
    %c3 = arith.constant 3 : index
    %c0_19 = arith.constant 0 : index
    %39 = vector.load %arg5[%c3, %c0_19] : memref<8x256xf32, #tpu.memory_space<vmem>>, vector<1x128xf32>
    %40 = vector.broadcast %39 : vector<1x128xf32> to vector<8x128xf32>
    %41 = arith.mulf %38, %40 : vector<8x128xf32>
    %c4 = arith.constant 4 : index
    %c0_20 = arith.constant 0 : index
    %42 = vector.load %arg5[%c4, %c0_20] : memref<8x256xf32, #tpu.memory_space<vmem>>, vector<1x128xf32>
    %43 = vector.broadcast %42 : vector<1x128xf32> to vector<8x128xf32>
    %44 = arith.addf %41, %43 : vector<8x128xf32>
    %c512 = arith.constant 512 : index
    %c0_21 = arith.constant 0 : index
    %45 = vector.load %arg2[%c512, %c0_21] : memref<1024x256xbf16, #tpu.memory_space<vmem>>, vector<128x256xbf16>
    %46 = arith.truncf %44 : vector<8x128xf32> to vector<8x128xbf16>
    %cst_22 = arith.constant dense<0.000000e+00> : vector<8x256xf32>
    %47 = tpu.matmul %46, %45, %cst_22 {dimension_numbers = #tpu.dot_dimension_numbers<[1], [0], [0], [1], [0, 0, 1, 1], [], []>} : vector<8x128xbf16>, vector<128x256xbf16>, vector<8x256xf32> -> vector<8x256xf32>
    %c5 = arith.constant 5 : index
    %c0_23 = arith.constant 0 : index
    %48 = vector.load %arg5[%c5, %c0_23] : memref<8x256xf32, #tpu.memory_space<vmem>>, vector<1x256xf32>
    %49 = vector.broadcast %48 : vector<1x256xf32> to vector<8x256xf32>
    %50 = arith.addf %47, %49 : vector<8x256xf32>
    %51 = arith.truncf %50 : vector<8x256xf32> to vector<8x256xbf16>
    %cst_24 = arith.constant 0.000000e+00 : bf16
    %52 = vector.broadcast %cst_24 : bf16 to vector<8x256xbf16>
    %53 = arith.cmpf ogt, %51, %52 : vector<8x256xbf16>
    %54 = math.exp %51 : vector<8x256xbf16>
    %cst_25 = arith.constant 1.000000e+00 : bf16
    %55 = vector.broadcast %cst_25 : bf16 to vector<8x256xbf16>
    %56 = arith.subf %54, %55 : vector<8x256xbf16>
    %57 = arith.select %53, %51, %56 : vector<8x256xi1>, vector<8x256xbf16>
    %c768 = arith.constant 768 : index
    %c0_26 = arith.constant 0 : index
    %58 = vector.load %arg2[%c768, %c0_26] : memref<1024x256xbf16, #tpu.memory_space<vmem>>, vector<256x256xbf16>
    %cst_27 = arith.constant dense<0.000000e+00> : vector<8x256xf32>
    %59 = tpu.matmul %57, %58, %cst_27 {dimension_numbers = #tpu.dot_dimension_numbers<[1], [0], [0], [1], [0, 0, 1, 1], [], []>} : vector<8x256xbf16>, vector<256x256xbf16>, vector<8x256xf32> -> vector<8x256xf32>
    %c6 = arith.constant 6 : index
    %c0_28 = arith.constant 0 : index
    %60 = vector.load %arg5[%c6, %c0_28] : memref<8x256xf32, #tpu.memory_space<vmem>>, vector<1x256xf32>
    %61 = vector.broadcast %60 : vector<1x256xf32> to vector<8x256xf32>
    %62 = arith.addf %59, %61 : vector<8x256xf32>
    %63 = vector.extract_strided_slice %62 {offsets = [0, 0], sizes = [8, 128], strides = [1, 1]} : vector<8x256xf32> to vector<8x128xf32>
    %64 = arith.truncf %63 : vector<8x128xf32> to vector<8x128xbf16>
    %65 = vector.extract_strided_slice %62 {offsets = [0, 128], sizes = [8, 128], strides = [1, 1]} : vector<8x256xf32> to vector<8x128xf32>
    %66 = arith.truncf %65 : vector<8x128xf32> to vector<8x128xbf16>
    %67 = arith.negf %66 : vector<8x128xbf16>
    %68 = math.exp %67 : vector<8x128xbf16>
    %cst_29 = arith.constant 1.000000e+00 : bf16
    %69 = vector.broadcast %cst_29 : bf16 to vector<8x128xbf16>
    %70 = arith.addf %69, %68 : vector<8x128xbf16>
    %71 = arith.divf %69, %70 : vector<8x128xbf16>
    %72 = arith.mulf %64, %71 : vector<8x128xbf16>
    %73 = arith.extf %72 : vector<8x128xbf16> to vector<8x128xf32>
    %c0_30 = arith.constant 0 : index
    %c0_31 = arith.constant 0 : index
    %74 = vector.load %arg6[%c0_30, %c0_31] : memref<8x128xf32, #tpu.memory_space<vmem>>, vector<8x128xf32>
    tpu.vector_store %arg6[%c0_30, %c0_31], %73 {strides = array<i32>} : memref<8x128xf32, #tpu.memory_space<vmem>>, vector<8x128xf32>,
    return
  }
  func.func @transform_0(%arg0: i32) -> (i32, i32) {
    %c0_i32 = arith.constant 0 : i32
    %c0_i32_0 = arith.constant 0 : i32
    return %arg0, %c0_i32 : i32, i32
  }
  func.func @transform_1(%arg0: i32) -> (i32, i32) {
    %c0_i32 = arith.constant 0 : i32
    %c0_i32_0 = arith.constant 0 : i32
    %c0_i32_1 = arith.constant 0 : i32
    return %c0_i32, %c0_i32_0 : i32, i32
  }
  func.func @transform_2(%arg0: i32) -> (i32, i32) {
    %c0_i32 = arith.constant 0 : i32
    %c0_i32_0 = arith.constant 0 : i32
    %c0_i32_1 = arith.constant 0 : i32
    return %c0_i32, %c0_i32_0 : i32, i32
  }
  func.func @transform_3(%arg0: i32) -> (i32, i32) {
    %c0_i32 = arith.constant 0 : i32
    %c0_i32_0 = arith.constant 0 : i32
    %c0_i32_1 = arith.constant 0 : i32
    return %c0_i32, %c0_i32_0 : i32, i32
  }
  func.func @transform_4(%arg0: i32) -> (i32, i32) {
    %c0_i32 = arith.constant 0 : i32
    %c0_i32_0 = arith.constant 0 : i32
    %c0_i32_1 = arith.constant 0 : i32
    return %c0_i32, %c0_i32_0 : i32, i32
  }
  func.func @transform_5(%arg0: i32) -> (i32, i32) {
    %c0_i32 = arith.constant 0 : i32
    %c0_i32_0 = arith.constant 0 : i32
    return %arg0, %c0_i32 : i32, i32
  }
}

</mosaic_0001>

<llo_original>
// kernel: tpu_custom_call.1
$region0: #{tpu_custom_call.1}
  #allocation0 [shape = 'u32[]', space=smem, size = 0x4, offset = 0x4, fixed_abs, tag = 'smem constant byte address 0x4 - core index']
  #allocation1 [shape = 'u32[144,128]{1,0:T(1,128)}', space=vmem, size = 0x12000, scoped, tag = 'internal scratch']
  %s0 = inlined_call_operand.hbm [shape: f32[8,16], index: 0, kind: input, shape index: {}]
  %s1 = inlined_call_operand.hbm [shape: bf16[1024,256], index: 1, kind: input, shape index: {}]
  %s2 = inlined_call_operand.hbm [shape: f32[16,128], index: 2, kind: input, shape index: {}]
  %s3 = inlined_call_operand.hbm [shape: f32[128,128], index: 3, kind: input, shape index: {}]
  %s4 = inlined_call_operand.hbm [shape: f32[8,256], index: 4, kind: input, shape index: {}]
  %s5 = inlined_call_operand.hbm [shape: f32[8,128], index: 5, kind: output, shape index: {}]
  %s6 = sld [smem:[#allocation0]]
  $region50: #{tpu_custom_call.1} parent=0
    _
  %s8 = ssub.s32 1, %s6
  %s9 = scalar_select 0, %s8, %s6
  $region1: #{tpu_custom_call.1} parent=0
    #allocation2 [shape = 'u8[4096]{0}', space=vmem, size = 0x1000, scoped, tag = 'input window, operand 0, single buffered']
    #allocation3 [shape = 's32[1]{0}', space=sflag, size = 0x4, scoped, tag = 'scoped memory for tpu_custom_call.1']
    #allocation4 [shape = 's32[1]{0}', space=sflag, size = 0x4, scoped, tag = 'scoped memory for tpu_custom_call.1']
    #allocation5 [shape = 'u8[524288]{0}', space=vmem, size = 0x80000, scoped, tag = 'input window, operand 1, single buffered']
    #allocation6 [shape = 's32[1]{0}', space=sflag, size = 0x4, scoped, tag = 'scoped memory for tpu_custom_call.1']
    #allocation7 [shape = 'u8[8192]{0}', space=vmem, size = 0x2000, scoped, tag = 'input window, operand 2, single buffered']
    #allocation8 [shape = 'u8[65536]{0}', space=vmem, size = 0x10000, scoped, tag = 'input window, operand 3, single buffered']
    #allocation9 [shape = 's32[1]{0}', space=sflag, size = 0x4, scoped, tag = 'scoped memory for tpu_custom_call.1']
    #allocation10 [shape = 'u8[8192]{0}', space=vmem, size = 0x2000, scoped, tag = 'input window, operand 4, single buffered']
    #allocation11 [shape = 'u8[4096]{0}', space=vmem, size = 0x1000, scoped, tag = 'output window, operand 0, single buffered']
    %10 = vsyncpa [#allocation3], 0
    %11 = vsyncpa [#allocation6], 0
    %12 = vsyncpa [#allocation9], 0
    %13 = vsyncpa [#allocation4], 0
    // Predicated region
    $region2: #{tpu_custom_call.1} parent=1 // pred_check
      _
    $region3: #{tpu_custom_call.1} parent=1 // pred_check_branch
      %15 = sbr.rel (0) target = $region5
    $region4: #{tpu_custom_call.1} parent=1 // pred_region
      %s17 = ssub.s32 128, 128
      %18 = vsyncadd [#allocation3], %s17
      %s20 = sshll.u32 [#allocation2], 4
      %s21 = int_to_ptr.vmem [resolvable:$true] %s20
      %23 = dma.hbm_to_vmem [thread:$0]  %s0, 128, %s21, [#allocation3]
    $region5: #{tpu_custom_call.1} parent=1 // pred_fallthru
      _
    // Predicated region
    $region6: #{tpu_custom_call.1} parent=1 // pred_check
      _
    $region7: #{tpu_custom_call.1} parent=1 // pred_check_branch
      %25 = sbr.rel (0) target = $region9
    $region8: #{tpu_custom_call.1} parent=1 // pred_region
      %s27 = ssub.s32 16384, 16384
      %28 = vsyncadd [#allocation6], %s27
      %s29 = sshll.u32 [#allocation5], 4
      %s30 = int_to_ptr.vmem [resolvable:$true] %s29
      %35 = dma.hbm_to_vmem [thread:$0]  %s1, 16384, %s30, [#allocation6], 128, 128, 8
    $region9: #{tpu_custom_call.1} parent=1 // pred_fallthru
      _
    // Predicated region
    $region10: #{tpu_custom_call.1} parent=1 // pred_check
      _
    $region11: #{tpu_custom_call.1} parent=1 // pred_check_branch
      %37 = sbr.rel (0) target = $region13
    $region12: #{tpu_custom_call.1} parent=1 // pred_region
      %s39 = ssub.s32 256, 256
      %40 = vsyncadd [#allocation6], %s39
      %s41 = sshll.u32 [#allocation7], 4
      %s42 = int_to_ptr.vmem [resolvable:$true] %s41
      %47 = dma.hbm_to_vmem [thread:$0]  %s2, 256, %s42, [#allocation6], 128, 128, 8
    $region13: #{tpu_custom_call.1} parent=1 // pred_fallthru
      _
    // Predicated region
    $region14: #{tpu_custom_call.1} parent=1 // pred_check
      _
    $region15: #{tpu_custom_call.1} parent=1 // pred_check_branch
      %49 = sbr.rel (0) target = $region17
    $region16: #{tpu_custom_call.1} parent=1 // pred_region
      %s51 = ssub.s32 2048, 2048
      %52 = vsyncadd [#allocation9], %s51
      %s53 = sshll.u32 [#allocation8], 4
      %s54 = int_to_ptr.vmem [resolvable:$true] %s53
      %59 = dma.hbm_to_vmem [thread:$0]  %s3, 2048, %s54, [#allocation9], 128, 128, 8
    $region17: #{tpu_custom_call.1} parent=1 // pred_fallthru
      _
    // Predicated region
    $region18: #{tpu_custom_call.1} parent=1 // pred_check
      _
    $region19: #{tpu_custom_call.1} parent=1 // pred_check_branch
      %61 = sbr.rel (0) target = $region21
    $region20: #{tpu_custom_call.1} parent=1 // pred_region
      %s63 = ssub.s32 256, 256
      %64 = vsyncadd [#allocation9], %s63
      %s66 = sshll.u32 [#allocation10], 4
      %s67 = int_to_ptr.vmem [resolvable:$true] %s66
      %69 = dma.hbm_to_vmem [thread:$0]  %s4, 256, %s67, [#allocation9]
    $region21: #{tpu_custom_call.1} parent=1 // pred_fallthru
      _
    // Predicated region
    $region22: #{tpu_custom_call.1} parent=1 // pred_check
      _
    $region23: #{tpu_custom_call.1} parent=1 // pred_check_branch
      %71 = sbr.rel (0) target = $region25
    $region24: #{tpu_custom_call.1} parent=1 // pred_region
      %72 = dma.done [#allocation3], 128
    $region25: #{tpu_custom_call.1} parent=1 // pred_fallthru
      _
    // Predicated region
    $region26: #{tpu_custom_call.1} parent=1 // pred_check
      _
    $region27: #{tpu_custom_call.1} parent=1 // pred_check_branch
      %74 = sbr.rel (0) target = $region29
    $region28: #{tpu_custom_call.1} parent=1 // pred_region
      %75 = dma.done [#allocation6], 16384
    $region29: #{tpu_custom_call.1} parent=1 // pred_fallthru
      _
    // Predicated region
    $region30: #{tpu_custom_call.1} parent=1 // pred_check
      _
    $region31: #{tpu_custom_call.1} parent=1 // pred_check_branch
      %77 = sbr.rel (0) target = $region33
    $region32: #{tpu_custom_call.1} parent=1 // pred_region
      %78 = dma.done [#allocation6], 256
    $region33: #{tpu_custom_call.1} parent=1 // pred_fallthru
      _
    // Predicated region
    $region34: #{tpu_custom_call.1} parent=1 // pred_check
      _
    $region35: #{tpu_custom_call.1} parent=1 // pred_check_branch
      %80 = sbr.rel (0) target = $region37
    $region36: #{tpu_custom_call.1} parent=1 // pred_region
      %81 = dma.done [#allocation9], 2048
    $region37: #{tpu_custom_call.1} parent=1 // pred_fallthru
      _
    // Predicated region
    $region38: #{tpu_custom_call.1} parent=1 // pred_check
      _
    $region39: #{tpu_custom_call.1} parent=1 // pred_check_branch
      %83 = sbr.rel (0) target = $region41
    $region40: #{tpu_custom_call.1} parent=1 // pred_region
      %84 = dma.done [#allocation9], 256
    $region41: #{tpu_custom_call.1} parent=1 // pred_fallthru
      _
    %v87 = vld [vmem:[#allocation2] sm:$0xff]
    %v88 = vld [vmem:[#allocation7] sm:$0xff]
    %v89 = vld [vmem:[#allocation7 + $0x8] sm:$0xff]
    %v90 = vld [vmem:[#allocation10] ss:$0 sm:$0xff]
    %vm91 = vcmask 130048
    %v93 = vsel %vm91, %v87, 0
    %95 = vmatprep.subr.mxu0 0.0
    %96 = vmatpush1.msra.mxu0 0.0
    %97 = vmatprep.subr.mxu0 0.0
    %98 = vmatpush1.msra.mxu0 0.0
    %99 = vmatprep.subr.mxu0 0.0
    %100 = vmatpush1.msra.mxu0 0.0
    %101 = vmatprep.subr.mxu0 0.0
    %102 = vmatpush1.msra.mxu0 0.0
    %103 = vmatprep.subr.mxu0 0.0
    %104 = vmatpush1.msra.mxu0 0.0
    %105 = vmatprep.subr.mxu0 0.0
    %106 = vmatpush1.msra.mxu0 0.0
    %107 = vmatprep.subr.mxu0 0.0
    %108 = vmatpush1.msra.mxu0 0.0
    %109 = vmatprep.subr.mxu0 0.0
    %110 = vmatpush1.msra.mxu0 0.0
    %111 = vmatprep.subr.mxu0 0.0
    %112 = vmatpush1.msra.mxu0 0.0
    %113 = vmatprep.subr.mxu0 0.0
    %114 = vmatpush1.msra.mxu0 0.0
    %115 = vmatprep.subr.mxu0 0.0
    %116 = vmatpush1.msra.mxu0 0.0
    %117 = vmatprep.subr.mxu0 0.0
    %118 = vmatpush1.msra.mxu0 0.0
    %119 = vmatprep.subr.mxu0 0.0
    %120 = vmatpush1.msra.mxu0 0.0
    %121 = vmatprep.subr.mxu0 0.0
    %122 = vmatpush1.msra.mxu0 0.0
    %123 = vmatprep.subr.mxu0 0.0
    %124 = vmatpush1.msra.mxu0 %v89
    %125 = vmatprep.subr.mxu0 0.0
    %126 = vmatpush1.msra.mxu0 %v88
    %127 = vmatprep.subr.mxu0 0.0
    %128 = vmatpush2.msra.mxu0 0.0
    %129 = vmatprep.subr.mxu0 0.0
    %130 = vmatpush2.msra.mxu0 0.0
    %131 = vmatprep.subr.mxu0 0.0
    %132 = vmatpush2.msra.mxu0 0.0
    %133 = vmatprep.subr.mxu0 0.0
    %134 = vmatpush2.msra.mxu0 0.0
    %135 = vmatprep.subr.mxu0 0.0
    %136 = vmatpush2.msra.mxu0 0.0
    %137 = vmatprep.subr.mxu0 0.0
    %138 = vmatpush2.msra.mxu0 0.0
    %139 = vmatprep.subr.mxu0 0.0
    %140 = vmatpush2.msra.mxu0 0.0
    %141 = vmatprep.subr.mxu0 0.0
    %142 = vmatpush2.msra.mxu0 0.0
    %143 = vmatprep.subr.mxu0 0.0
    %144 = vmatpush2.msra.mxu0 0.0
    %145 = vmatprep.subr.mxu0 0.0
    %146 = vmatpush2.msra.mxu0 0.0
    %147 = vmatprep.subr.mxu0 0.0
    %148 = vmatpush2.msra.mxu0 0.0
    %149 = vmatprep.subr.mxu0 0.0
    %150 = vmatpush2.msra.mxu0 0.0
    %151 = vmatprep.subr.mxu0 0.0
    %152 = vmatpush2.msra.mxu0 0.0
    %153 = vmatprep.subr.mxu0 0.0
    %154 = vmatpush2.msra.mxu0 0.0
    %155 = vmatprep.subr.mxu0 0.0
    %156 = vmatpush2.msra.mxu0 0.0
    %157 = vmatprep.subr.mxu0 0.0
    %158 = vmatpush2.msra.mxu0 0.0
    %159 = vmatprep.mubr.f32.mxu0 0.0
    %160 = vmatmul.mubr.f32.gmra.mxu0 %v93
    %v161 = vpop.f32.mrf.mxu0
    %v162 = vadd.f32 %v90, %v161
    %v163 = vpop.f32.mrf.mxu0
    %164 = vdwg.mxu0
    %v165 = vpack.c.bf16 %v162, %v162
    %vm166 = vcmp.gt.bf16.partialorder %v165, 0
    %v168 = vmul.bf16 %v165, 1069105081
    %v169 = vpow.bf16.pop %v168
    %v170 = vsub.bf16 %v169, 1065369472
    %v171 = vsel %vm166, %v165, %v170
    %v172 = vld [vmem:[#allocation5] sm:$0xff]
    %v173 = vld [vmem:[#allocation5 + $0x8] sm:$0xff]
    %v174 = vld [vmem:[#allocation5 + $0x10] sm:$0xff]
    %v175 = vld [vmem:[#allocation5 + $0x18] sm:$0xff]
    %v176 = vld [vmem:[#allocation5 + $0x20] sm:$0xff]
    %v177 = vld [vmem:[#allocation5 + $0x28] sm:$0xff]
    %v178 = vld [vmem:[#allocation5 + $0x30] sm:$0xff]
    %v179 = vld [vmem:[#allocation5 + $0x38] sm:$0xff]
    %v180 = vld [vmem:[#allocation5 + $0x40] sm:$0xff]
    %v181 = vld [vmem:[#allocation5 + $0x48] sm:$0xff]
    %v182 = vld [vmem:[#allocation5 + $0x50] sm:$0xff]
    %v183 = vld [vmem:[#allocation5 + $0x58] sm:$0xff]
    %v184 = vld [vmem:[#allocation5 + $0x60] sm:$0xff]
    %v185 = vld [vmem:[#allocation5 + $0x68] sm:$0xff]
    %v186 = vld [vmem:[#allocation5 + $0x70] sm:$0xff]
    %v187 = vld [vmem:[#allocation5 + $0x78] sm:$0xff]
    %s188 = scalar_lea.vmem [#allocation10], 1
    %v189 = vld [vmem:[%s188] ss:$8 sm:$0x3]
    %v191 = vlaneseq
    %v192 = vshrl.u32 %v191, 7
    %v193 = vsub.s32 0, %v192
    %v194 = vrot.slane %v189, %v193
    %v195 = vlaneseq
    %v196 = vshrl.u32 %v195, 7
    %v197 = vsub.s32 1, %v196
    %v198 = vrot.slane %v189, %v197
    %v217 = vunpack.c.l.b16 %v172
    %v218 = vunpack.c.h.b16 %v172
    %v219 = vunpack.c.l.b16 %v173
    %v220 = vunpack.c.h.b16 %v173
    %v221 = vunpack.c.l.b16 %v174
    %v222 = vunpack.c.h.b16 %v174
    %v223 = vunpack.c.l.b16 %v175
    %v224 = vunpack.c.h.b16 %v175
    %v225 = vunpack.c.l.b16 %v176
    %v226 = vunpack.c.h.b16 %v176
    %v227 = vunpack.c.l.b16 %v177
    %v228 = vunpack.c.h.b16 %v177
    %v229 = vunpack.c.l.b16 %v178
    %v230 = vunpack.c.h.b16 %v178
    %v231 = vunpack.c.l.b16 %v179
    %v232 = vunpack.c.h.b16 %v179
    %v233 = vunpack.c.l.b16 %v180
    %v234 = vunpack.c.h.b16 %v180
    %v235 = vunpack.c.l.b16 %v181
    %v236 = vunpack.c.h.b16 %v181
    %v237 = vunpack.c.l.b16 %v182
    %v238 = vunpack.c.h.b16 %v182
    %v239 = vunpack.c.l.b16 %v183
    %v240 = vunpack.c.h.b16 %v183
    %v241 = vunpack.c.l.b16 %v184
    %v242 = vunpack.c.h.b16 %v184
    %v243 = vunpack.c.l.b16 %v185
    %v244 = vunpack.c.h.b16 %v185
    %v245 = vunpack.c.l.b16 %v186
    %v246 = vunpack.c.h.b16 %v186
    %v247 = vunpack.c.l.b16 %v187
    %v248 = vunpack.c.h.b16 %v187
    %v249 = vpack.c.b16 %v219, %v217
    %v250 = vpack.c.b16 %v220, %v218
    %v251 = vpack.c.b16 %v223, %v221
    %v252 = vpack.c.b16 %v224, %v222
    %v253 = vpack.c.b16 %v227, %v225
    %v254 = vpack.c.b16 %v228, %v226
    %v255 = vpack.c.b16 %v231, %v229
    %v256 = vpack.c.b16 %v232, %v230
    %v257 = vpack.c.b16 %v235, %v233
    %v258 = vpack.c.b16 %v236, %v234
    %v259 = vpack.c.b16 %v239, %v237
    %v260 = vpack.c.b16 %v240, %v238
    %v261 = vpack.c.b16 %v243, %v241
    %v262 = vpack.c.b16 %v244, %v242
    %v263 = vpack.c.b16 %v247, %v245
    %v264 = vpack.c.b16 %v248, %v246
    %281 = vmatprep.subr.bf16.mxu0 %v264
    %282 = vmatpush1.bf16.msra.mxu0 %v263
    %283 = vmatprep.subr.bf16.mxu0 %v262
    %284 = vmatpush1.bf16.msra.mxu0 %v261
    %285 = vmatprep.subr.bf16.mxu0 %v260
    %286 = vmatpush1.bf16.msra.mxu0 %v259
    %287 = vmatprep.subr.bf16.mxu0 %v258
    %288 = vmatpush1.bf16.msra.mxu0 %v257
    %289 = vmatprep.subr.bf16.mxu0 %v256
    %290 = vmatpush1.bf16.msra.mxu0 %v255
    %291 = vmatprep.subr.bf16.mxu0 %v254
    %292 = vmatpush1.bf16.msra.mxu0 %v253
    %293 = vmatprep.subr.bf16.mxu0 %v252
    %294 = vmatpush1.bf16.msra.mxu0 %v251
    %295 = vmatprep.subr.bf16.mxu0 %v250
    %296 = vmatpush1.bf16.msra.mxu0 %v249
    %297 = vmatprep.subr.bf16.mxu0 0
    %298 = vmatpush2.bf16.msra.mxu0 0
    %299 = vmatprep.subr.bf16.mxu0 0
    %300 = vmatpush2.bf16.msra.mxu0 0
    %301 = vmatprep.subr.bf16.mxu0 0
    %302 = vmatpush2.bf16.msra.mxu0 0
    %303 = vmatprep.subr.bf16.mxu0 0
    %304 = vmatpush2.bf16.msra.mxu0 0
    %305 = vmatprep.subr.bf16.mxu0 0
    %306 = vmatpush2.bf16.msra.mxu0 0
    %307 = vmatprep.subr.bf16.mxu0 0
    %308 = vmatpush2.bf16.msra.mxu0 0
    %309 = vmatprep.subr.bf16.mxu0 0
    %310 = vmatpush2.bf16.msra.mxu0 0
    %311 = vmatprep.subr.bf16.mxu0 0
    %312 = vmatpush2.bf16.msra.mxu0 0
    %313 = vmatprep.mubr.bf16.mxu0 0
    %314 = vmatmul.mubr.bf16.gmra.mxu0 %v171
    %v315 = vpop.f32.mrf.mxu0
    %v316 = vadd.f32 %v194, %v315
    %v317 = vpop.f32.mrf.mxu0
    %v318 = vadd.f32 %v198, %v317
    %v319 = vpop.f32.mrf.mxu0
    %v320 = vpop.f32.mrf.mxu0
    %321 = vdwg.mxu0
    %v322 = vpack.c.bf16 %v316, %v316
    %v323 = vpack.c.bf16 %v318, %v318
    %v324 = vtanh.bf16.pop %v322
    %v325 = vtanh.bf16.pop %v323
    %v326 = vld [vmem:[#allocation5 + $0x100] sm:$0xf]
    %v327 = vld [vmem:[#allocation5 + $0x108] sm:$0xf]
    %v328 = vld [vmem:[#allocation5 + $0x110] sm:$0xf]
    %v329 = vld [vmem:[#allocation5 + $0x118] sm:$0xf]
    %v330 = vld [vmem:[#allocation5 + $0x120] sm:$0xf]
    %v331 = vld [vmem:[#allocation5 + $0x128] sm:$0xf]
    %v332 = vld [vmem:[#allocation5 + $0x130] sm:$0xf]
    %v333 = vld [vmem:[#allocation5 + $0x138] sm:$0xf]
    %v334 = vld [vmem:[#allocation5 + $0x140] sm:$0xf]
    %v335 = vld [vmem:[#allocation5 + $0x148] sm:$0xf]
    %v336 = vld [vmem:[#allocation5 + $0x150] sm:$0xf]
    %v337 = vld [vmem:[#allocation5 + $0x158] sm:$0xf]
    %v338 = vld [vmem:[#allocation5 + $0x160] sm:$0xf]
    %v339 = vld [vmem:[#allocation5 + $0x168] sm:$0xf]
    %v340 = vld [vmem:[#allocation5 + $0x170] sm:$0xf]
    %v341 = vld [vmem:[#allocation5 + $0x178] sm:$0xf]
    %v342 = vld [vmem:[#allocation5 + $0x180] sm:$0xf]
    %v343 = vld [vmem:[#allocation5 + $0x188] sm:$0xf]
    %v344 = vld [vmem:[#allocation5 + $0x190] sm:$0xf]
    %v345 = vld [vmem:[#allocation5 + $0x198] sm:$0xf]
    %v346 = vld [vmem:[#allocation5 + $0x1a0] sm:$0xf]
    %v347 = vld [vmem:[#allocation5 + $0x1a8] sm:$0xf]
    %v348 = vld [vmem:[#allocation5 + $0x1b0] sm:$0xf]
    %v349 = vld [vmem:[#allocation5 + $0x1b8] sm:$0xf]
    %v350 = vld [vmem:[#allocation5 + $0x1c0] sm:$0xf]
    %v351 = vld [vmem:[#allocation5 + $0x1c8] sm:$0xf]
    %v352 = vld [vmem:[#allocation5 + $0x1d0] sm:$0xf]
    %v353 = vld [vmem:[#allocation5 + $0x1d8] sm:$0xf]
    %v354 = vld [vmem:[#allocation5 + $0x1e0] sm:$0xf]
    %v355 = vld [vmem:[#allocation5 + $0x1e8] sm:$0xf]
    %v356 = vld [vmem:[#allocation5 + $0x1f0] sm:$0xf]
    %v357 = vld [vmem:[#allocation5 + $0x1f8] sm:$0xf]
    %v358 = vld [vmem:[#allocation10 + $0x2] ss:$0 sm:$0xff]
    %v391 = vunpack.c.l.b16 %v326
    %v392 = vunpack.c.l.b16 %v327
    %v393 = vunpack.c.l.b16 %v328
    %v394 = vunpack.c.l.b16 %v329
    %v395 = vunpack.c.l.b16 %v330
    %v396 = vunpack.c.l.b16 %v331
    %v397 = vunpack.c.l.b16 %v332
    %v398 = vunpack.c.l.b16 %v333
    %v399 = vunpack.c.l.b16 %v334
    %v400 = vunpack.c.l.b16 %v335
    %v401 = vunpack.c.l.b16 %v336
    %v402 = vunpack.c.l.b16 %v337
    %v403 = vunpack.c.l.b16 %v338
    %v404 = vunpack.c.l.b16 %v339
    %v405 = vunpack.c.l.b16 %v340
    %v406 = vunpack.c.l.b16 %v341
    %v407 = vunpack.c.l.b16 %v342
    %v408 = vunpack.c.l.b16 %v343
    %v409 = vunpack.c.l.b16 %v344
    %v410 = vunpack.c.l.b16 %v345
    %v411 = vunpack.c.l.b16 %v346
    %v412 = vunpack.c.l.b16 %v347
    %v413 = vunpack.c.l.b16 %v348
    %v414 = vunpack.c.l.b16 %v349
    %v415 = vunpack.c.l.b16 %v350
    %v416 = vunpack.c.l.b16 %v351
    %v417 = vunpack.c.l.b16 %v352
    %v418 = vunpack.c.l.b16 %v353
    %v419 = vunpack.c.l.b16 %v354
    %v420 = vunpack.c.l.b16 %v355
    %v421 = vunpack.c.l.b16 %v356
    %v422 = vunpack.c.l.b16 %v357
    %v423 = vpack.c.b16 %v392, %v391
    %v424 = vpack.c.b16 %v394, %v393
    %v425 = vpack.c.b16 %v396, %v395
    %v426 = vpack.c.b16 %v398, %v397
    %v427 = vpack.c.b16 %v400, %v399
    %v428 = vpack.c.b16 %v402, %v401
    %v429 = vpack.c.b16 %v404, %v403
    %v430 = vpack.c.b16 %v406, %v405
    %v431 = vpack.c.b16 %v408, %v407
    %v432 = vpack.c.b16 %v410, %v409
    %v433 = vpack.c.b16 %v412, %v411
    %v434 = vpack.c.b16 %v414, %v413
    %v435 = vpack.c.b16 %v416, %v415
    %v436 = vpack.c.b16 %v418, %v417
    %v437 = vpack.c.b16 %v420, %v419
    %v438 = vpack.c.b16 %v422, %v421
    %455 = vmatprep.subr.bf16.mxu0 0
    %456 = vmatpush1.bf16.msra.mxu0 %v430
    %457 = vmatprep.subr.bf16.mxu0 0
    %458 = vmatpush1.bf16.msra.mxu0 %v429
    %459 = vmatprep.subr.bf16.mxu0 0
    %460 = vmatpush1.bf16.msra.mxu0 %v428
    %461 = vmatprep.subr.bf16.mxu0 0
    %462 = vmatpush1.bf16.msra.mxu0 %v427
    %463 = vmatprep.subr.bf16.mxu0 0
    %464 = vmatpush1.bf16.msra.mxu0 %v426
    %465 = vmatprep.subr.bf16.mxu0 0
    %466 = vmatpush1.bf16.msra.mxu0 %v425
    %467 = vmatprep.subr.bf16.mxu0 0
    %468 = vmatpush1.bf16.msra.mxu0 %v424
    %469 = vmatprep.subr.bf16.mxu0 0
    %470 = vmatpush1.bf16.msra.mxu0 %v423
    %471 = vmatprep.subr.bf16.mxu0 0
    %472 = vmatpush2.bf16.msra.mxu0 %v438
    %473 = vmatprep.subr.bf16.mxu0 0
    %474 = vmatpush2.bf16.msra.mxu0 %v437
    %475 = vmatprep.subr.bf16.mxu0 0
    %476 = vmatpush2.bf16.msra.mxu0 %v436
    %477 = vmatprep.subr.bf16.mxu0 0
    %478 = vmatpush2.bf16.msra.mxu0 %v435
    %479 = vmatprep.subr.bf16.mxu0 0
    %480 = vmatpush2.bf16.msra.mxu0 %v434
    %481 = vmatprep.subr.bf16.mxu0 0
    %482 = vmatpush2.bf16.msra.mxu0 %v433
    %483 = vmatprep.subr.bf16.mxu0 0
    %484 = vmatpush2.bf16.msra.mxu0 %v432
    %485 = vmatprep.subr.bf16.mxu0 0
    %486 = vmatpush2.bf16.msra.mxu0 %v431
    %487 = vmatprep.mubr.bf16.mxu0 %v325
    %488 = vmatmul.mubr.bf16.gmra.mxu0 %v324
    %v489 = vpop.f32.mrf.mxu0
    %v490 = vadd.f32 %v358, %v489
    %v491 = vpop.f32.mrf.mxu0
    %v492 = vpop.f32.mrf.mxu0
    %v493 = vpop.f32.mrf.mxu0
    %494 = vdwg.mxu0
    %v495 = vpack.c.bf16 %v490, %v490
    %v496 = vtanh.bf16.pop %v495
    %v497 = vunpack.c.l.bf16 %v171
    %v498 = vunpack.c.l.bf16 %v496
    %v499 = vadd.f32 %v497, %v498
    %v500 = vld [vmem:[#allocation8] sm:$0xff]
    %v501 = vld [vmem:[#allocation8 + $0x8] sm:$0xff]
    %v502 = vld [vmem:[#allocation8 + $0x10] sm:$0xff]
    %v503 = vld [vmem:[#allocation8 + $0x18] sm:$0xff]
    %v504 = vld [vmem:[#allocation8 + $0x20] sm:$0xff]
    %v505 = vld [vmem:[#allocation8 + $0x28] sm:$0xff]
    %v506 = vld [vmem:[#allocation8 + $0x30] sm:$0xff]
    %v507 = vld [vmem:[#allocation8 + $0x38] sm:$0xff]
    %v508 = vld [vmem:[#allocation8 + $0x40] sm:$0xff]
    %v509 = vld [vmem:[#allocation8 + $0x48] sm:$0xff]
    %v510 = vld [vmem:[#allocation8 + $0x50] sm:$0xff]
    %v511 = vld [vmem:[#allocation8 + $0x58] sm:$0xff]
    %v512 = vld [vmem:[#allocation8 + $0x60] sm:$0xff]
    %v513 = vld [vmem:[#allocation8 + $0x68] sm:$0xff]
    %v514 = vld [vmem:[#allocation8 + $0x70] sm:$0xff]
    %v515 = vld [vmem:[#allocation8 + $0x78] sm:$0xff]
    %516 = vmatprep.subr.mxu0 0.0
    %517 = vmatpush1.msra.mxu0 %v515
    %518 = vmatprep.subr.mxu0 0.0
    %519 = vmatpush1.msra.mxu0 %v514
    %520 = vmatprep.subr.mxu0 0.0
    %521 = vmatpush1.msra.mxu0 %v513
    %522 = vmatprep.subr.mxu0 0.0
    %523 = vmatpush1.msra.mxu0 %v512
    %524 = vmatprep.subr.mxu0 0.0
    %525 = vmatpush1.msra.mxu0 %v511
    %526 = vmatprep.subr.mxu0 0.0
    %527 = vmatpush1.msra.mxu0 %v510
    %528 = vmatprep.subr.mxu0 0.0
    %529 = vmatpush1.msra.mxu0 %v509
    %530 = vmatprep.subr.mxu0 0.0
    %531 = vmatpush1.msra.mxu0 %v508
    %532 = vmatprep.subr.mxu0 0.0
    %533 = vmatpush1.msra.mxu0 %v507
    %534 = vmatprep.subr.mxu0 0.0
    %535 = vmatpush1.msra.mxu0 %v506
    %536 = vmatprep.subr.mxu0 0.0
    %537 = vmatpush1.msra.mxu0 %v505
    %538 = vmatprep.subr.mxu0 0.0
    %539 = vmatpush1.msra.mxu0 %v504
    %540 = vmatprep.subr.mxu0 0.0
    %541 = vmatpush1.msra.mxu0 %v503
    %542 = vmatprep.subr.mxu0 0.0
    %543 = vmatpush1.msra.mxu0 %v502
    %544 = vmatprep.subr.mxu0 0.0
    %545 = vmatpush1.msra.mxu0 %v501
    %546 = vmatprep.subr.mxu0 0.0
    %547 = vmatpush1.msra.mxu0 %v500
    %548 = vmatprep.subr.mxu0 0.0
    %549 = vmatpush2.msra.mxu0 0.0
    %550 = vmatprep.subr.mxu0 0.0
    %551 = vmatpush2.msra.mxu0 0.0
    %552 = vmatprep.subr.mxu0 0.0
    %553 = vmatpush2.msra.mxu0 0.0
    %554 = vmatprep.subr.mxu0 0.0
    %555 = vmatpush2.msra.mxu0 0.0
    %556 = vmatprep.subr.mxu0 0.0
    %557 = vmatpush2.msra.mxu0 0.0
    %558 = vmatprep.subr.mxu0 0.0
    %559 = vmatpush2.msra.mxu0 0.0
    %560 = vmatprep.subr.mxu0 0.0
    %561 = vmatpush2.msra.mxu0 0.0
    %562 = vmatprep.subr.mxu0 0.0
    %563 = vmatpush2.msra.mxu0 0.0
    %564 = vmatprep.subr.mxu0 0.0
    %565 = vmatpush2.msra.mxu0 0.0
    %566 = vmatprep.subr.mxu0 0.0
    %567 = vmatpush2.msra.mxu0 0.0
    %568 = vmatprep.subr.mxu0 0.0
    %569 = vmatpush2.msra.mxu0 0.0
    %570 = vmatprep.subr.mxu0 0.0
    %571 = vmatpush2.msra.mxu0 0.0
    %572 = vmatprep.subr.mxu0 0.0
    %573 = vmatpush2.msra.mxu0 0.0
    %574 = vmatprep.subr.mxu0 0.0
    %575 = vmatpush2.msra.mxu0 0.0
    %576 = vmatprep.subr.mxu0 0.0
    %577 = vmatpush2.msra.mxu0 0.0
    %578 = vmatprep.subr.mxu0 0.0
    %579 = vmatpush2.msra.mxu0 0.0
    %580 = vmatprep.mubr.f32.mxu0 0.0
    %581 = vmatmul.mubr.f32.gmra.mxu0 %v499
    %v582 = vpop.f32.mrf.mxu0
    %v583 = vadd.f32 0.0, %v582
    %v584 = vpop.f32.mrf.mxu0
    %585 = vdwg.mxu0
    %v586 = vsub.f32 %v499, %v583
    %v587 = vmul.f32 %v586, %v586
    %588 = vmatprep.subr.mxu0 0.0
    %589 = vmatpush1.msra.mxu0 %v515
    %590 = vmatprep.subr.mxu0 0.0
    %591 = vmatpush1.msra.mxu0 %v514
    %592 = vmatprep.subr.mxu0 0.0
    %593 = vmatpush1.msra.mxu0 %v513
    %594 = vmatprep.subr.mxu0 0.0
    %595 = vmatpush1.msra.mxu0 %v512
    %596 = vmatprep.subr.mxu0 0.0
    %597 = vmatpush1.msra.mxu0 %v511
    %598 = vmatprep.subr.mxu0 0.0
    %599 = vmatpush1.msra.mxu0 %v510
    %600 = vmatprep.subr.mxu0 0.0
    %601 = vmatpush1.msra.mxu0 %v509
    %602 = vmatprep.subr.mxu0 0.0
    %603 = vmatpush1.msra.mxu0 %v508
    %604 = vmatprep.subr.mxu0 0.0
    %605 = vmatpush1.msra.mxu0 %v507
    %606 = vmatprep.subr.mxu0 0.0
    %607 = vmatpush1.msra.mxu0 %v506
    %608 = vmatprep.subr.mxu0 0.0
    %609 = vmatpush1.msra.mxu0 %v505
    %610 = vmatprep.subr.mxu0 0.0
    %611 = vmatpush1.msra.mxu0 %v504
    %612 = vmatprep.subr.mxu0 0.0
    %613 = vmatpush1.msra.mxu0 %v503
    %614 = vmatprep.subr.mxu0 0.0
    %615 = vmatpush1.msra.mxu0 %v502
    %616 = vmatprep.subr.mxu0 0.0
    %617 = vmatpush1.msra.mxu0 %v501
    %618 = vmatprep.subr.mxu0 0.0
    %619 = vmatpush1.msra.mxu0 %v500
    %620 = vmatprep.subr.mxu0 0.0
    %621 = vmatpush2.msra.mxu0 0.0
    %622 = vmatprep.subr.mxu0 0.0
    %623 = vmatpush2.msra.mxu0 0.0
    %624 = vmatprep.subr.mxu0 0.0
    %625 = vmatpush2.msra.mxu0 0.0
    %626 = vmatprep.subr.mxu0 0.0
    %627 = vmatpush2.msra.mxu0 0.0
    %628 = vmatprep.subr.mxu0 0.0
    %629 = vmatpush2.msra.mxu0 0.0
    %630 = vmatprep.subr.mxu0 0.0
    %631 = vmatpush2.msra.mxu0 0.0
    %632 = vmatprep.subr.mxu0 0.0
    %633 = vmatpush2.msra.mxu0 0.0
    %634 = vmatprep.subr.mxu0 0.0
    %635 = vmatpush2.msra.mxu0 0.0
    %636 = vmatprep.subr.mxu0 0.0
    %637 = vmatpush2.msra.mxu0 0.0
    %638 = vmatprep.subr.mxu0 0.0
    %639 = vmatpush2.msra.mxu0 0.0
    %640 = vmatprep.subr.mxu0 0.0
    %641 = vmatpush2.msra.mxu0 0.0
    %642 = vmatprep.subr.mxu0 0.0
    %643 = vmatpush2.msra.mxu0 0.0
    %644 = vmatprep.subr.mxu0 0.0
    %645 = vmatpush2.msra.mxu0 0.0
    %646 = vmatprep.subr.mxu0 0.0
    %647 = vmatpush2.msra.mxu0 0.0
    %648 = vmatprep.subr.mxu0 0.0
    %649 = vmatpush2.msra.mxu0 0.0
    %650 = vmatprep.subr.mxu0 0.0
    %651 = vmatpush2.msra.mxu0 0.0
    %652 = vmatprep.mubr.f32.mxu0 0.0
    %653 = vmatmul.mubr.f32.gmra.mxu0 %v587
    %v654 = vpop.f32.mrf.mxu0
    %v655 = vadd.f32 1e-05, %v654
    %v656 = vpop.f32.mrf.mxu0
    %657 = vdwg.mxu0
    %v658 = vrsqrt.pop %v655
    %v659 = vmul.f32 %v586, %v658
    %v660 = vld [vmem:[#allocation10 + $0x3] ss:$0 sm:$0xff]
    %v661 = vmul.f32 %v659, %v660
    %v662 = vld [vmem:[#allocation10 + $0x4] ss:$0 sm:$0xff]
    %v663 = vadd.f32 %v661, %v662
    %v664 = vld [vmem:[#allocation5 + $0x200] sm:$0xff]
    %v665 = vld [vmem:[#allocation5 + $0x208] sm:$0xff]
    %v666 = vld [vmem:[#allocation5 + $0x210] sm:$0xff]
    %v667 = vld [vmem:[#allocation5 + $0x218] sm:$0xff]
    %v668 = vld [vmem:[#allocation5 + $0x220] sm:$0xff]
    %v669 = vld [vmem:[#allocation5 + $0x228] sm:$0xff]
    %v670 = vld [vmem:[#allocation5 + $0x230] sm:$0xff]
    %v671 = vld [vmem:[#allocation5 + $0x238] sm:$0xff]
    %v672 = vld [vmem:[#allocation5 + $0x240] sm:$0xff]
    %v673 = vld [vmem:[#allocation5 + $0x248] sm:$0xff]
    %v674 = vld [vmem:[#allocation5 + $0x250] sm:$0xff]
    %v675 = vld [vmem:[#allocation5 + $0x258] sm:$0xff]
    %v676 = vld [vmem:[#allocation5 + $0x260] sm:$0xff]
    %v677 = vld [vmem:[#allocation5 + $0x268] sm:$0xff]
    %v678 = vld [vmem:[#allocation5 + $0x270] sm:$0xff]
    %v679 = vld [vmem:[#allocation5 + $0x278] sm:$0xff]
    %v680 = vpack.c.bf16 %v663, %v663
    %s681 = scalar_lea.vmem [#allocation10], 5
    %v682 = vld [vmem:[%s681] ss:$8 sm:$0x3]
    %v684 = vlaneseq
    %v685 = vshrl.u32 %v684, 7
    %v686 = vsub.s32 0, %v685
    %v687 = vrot.slane %v682, %v686
    %v688 = vlaneseq
    %v689 = vshrl.u32 %v688, 7
    %v690 = vsub.s32 1, %v689
    %v691 = vrot.slane %v682, %v690
    %v710 = vunpack.c.l.b16 %v664
    %v711 = vunpack.c.h.b16 %v664
    %v712 = vunpack.c.l.b16 %v665
    %v713 = vunpack.c.h.b16 %v665
    %v714 = vunpack.c.l.b16 %v666
    %v715 = vunpack.c.h.b16 %v666
    %v716 = vunpack.c.l.b16 %v667
    %v717 = vunpack.c.h.b16 %v667
    %v718 = vunpack.c.l.b16 %v668
    %v719 = vunpack.c.h.b16 %v668
    %v720 = vunpack.c.l.b16 %v669
    %v721 = vunpack.c.h.b16 %v669
    %v722 = vunpack.c.l.b16 %v670
    %v723 = vunpack.c.h.b16 %v670
    %v724 = vunpack.c.l.b16 %v671
    %v725 = vunpack.c.h.b16 %v671
    %v726 = vunpack.c.l.b16 %v672
    %v727 = vunpack.c.h.b16 %v672
    %v728 = vunpack.c.l.b16 %v673
    %v729 = vunpack.c.h.b16 %v673
    %v730 = vunpack.c.l.b16 %v674
    %v731 = vunpack.c.h.b16 %v674
    %v732 = vunpack.c.l.b16 %v675
    %v733 = vunpack.c.h.b16 %v675
    %v734 = vunpack.c.l.b16 %v676
    %v735 = vunpack.c.h.b16 %v676
    %v736 = vunpack.c.l.b16 %v677
    %v737 = vunpack.c.h.b16 %v677
    %v738 = vunpack.c.l.b16 %v678
    %v739 = vunpack.c.h.b16 %v678
    %v740 = vunpack.c.l.b16 %v679
    %v741 = vunpack.c.h.b16 %v679
    %v742 = vpack.c.b16 %v712, %v710
    %v743 = vpack.c.b16 %v713, %v711
    %v744 = vpack.c.b16 %v716, %v714
    %v745 = vpack.c.b16 %v717, %v715
    %v746 = vpack.c.b16 %v720, %v718
    %v747 = vpack.c.b16 %v721, %v719
    %v748 = vpack.c.b16 %v724, %v722
    %v749 = vpack.c.b16 %v725, %v723
    %v750 = vpack.c.b16 %v728, %v726
    %v751 = vpack.c.b16 %v729, %v727
    %v752 = vpack.c.b16 %v732, %v730
    %v753 = vpack.c.b16 %v733, %v731
    %v754 = vpack.c.b16 %v736, %v734
    %v755 = vpack.c.b16 %v737, %v735
    %v756 = vpack.c.b16 %v740, %v738
    %v757 = vpack.c.b16 %v741, %v739
    %774 = vmatprep.subr.bf16.mxu0 %v757
    %775 = vmatpush1.bf16.msra.mxu0 %v756
    %776 = vmatprep.subr.bf16.mxu0 %v755
    %777 = vmatpush1.bf16.msra.mxu0 %v754
    %778 = vmatprep.subr.bf16.mxu0 %v753
    %779 = vmatpush1.bf16.msra.mxu0 %v752
    %780 = vmatprep.subr.bf16.mxu0 %v751
    %781 = vmatpush1.bf16.msra.mxu0 %v750
    %782 = vmatprep.subr.bf16.mxu0 %v749
    %783 = vmatpush1.bf16.msra.mxu0 %v748
    %784 = vmatprep.subr.bf16.mxu0 %v747
    %785 = vmatpush1.bf16.msra.mxu0 %v746
    %786 = vmatprep.subr.bf16.mxu0 %v745
    %787 = vmatpush1.bf16.msra.mxu0 %v744
    %788 = vmatprep.subr.bf16.mxu0 %v743
    %789 = vmatpush1.bf16.msra.mxu0 %v742
    %790 = vmatprep.subr.bf16.mxu0 0
    %791 = vmatpush2.bf16.msra.mxu0 0
    %792 = vmatprep.subr.bf16.mxu0 0
    %793 = vmatpush2.bf16.msra.mxu0 0
    %794 = vmatprep.subr.bf16.mxu0 0
    %795 = vmatpush2.bf16.msra.mxu0 0
    %796 = vmatprep.subr.bf16.mxu0 0
    %797 = vmatpush2.bf16.msra.mxu0 0
    %798 = vmatprep.subr.bf16.mxu0 0
    %799 = vmatpush2.bf16.msra.mxu0 0
    %800 = vmatprep.subr.bf16.mxu0 0
    %801 = vmatpush2.bf16.msra.mxu0 0
    %802 = vmatprep.subr.bf16.mxu0 0
    %803 = vmatpush2.bf16.msra.mxu0 0
    %804 = vmatprep.subr.bf16.mxu0 0
    %805 = vmatpush2.bf16.msra.mxu0 0
    %806 = vmatprep.mubr.bf16.mxu0 0
    %807 = vmatmul.mubr.bf16.gmra.mxu0 %v680
    %v808 = vpop.f32.mrf.mxu0
    %v809 = vadd.f32 %v687, %v808
    %v810 = vpop.f32.mrf.mxu0
    %v811 = vadd.f32 %v691, %v810
    %v812 = vpop.f32.mrf.mxu0
    %v813 = vpop.f32.mrf.mxu0
    %814 = vdwg.mxu0
    %v815 = vpack.c.bf16 %v809, %v809
    %v816 = vpack.c.bf16 %v811, %v811
    %vm817 = vcmp.gt.bf16.partialorder %v815, 0
    %vm818 = vcmp.gt.bf16.partialorder %v816, 0
    %v820 = vmul.bf16 %v815, 1069105081
    %v821 = vpow.bf16.pop %v820
    %v823 = vmul.bf16 %v816, 1069105081
    %v824 = vpow.bf16.pop %v823
    %v825 = vsub.bf16 %v821, 1065369472
    %v826 = vsub.bf16 %v824, 1065369472
    %v827 = vsel %vm817, %v815, %v825
    %v828 = vsel %vm818, %v816, %v826
    %v829 = vld [vmem:[#allocation5 + $0x300] sm:$0xff]
    %v830 = vld [vmem:[#allocation5 + $0x308] sm:$0xff]
    %v831 = vld [vmem:[#allocation5 + $0x310] sm:$0xff]
    %v832 = vld [vmem:[#allocation5 + $0x318] sm:$0xff]
    %v833 = vld [vmem:[#allocation5 + $0x320] sm:$0xff]
    %v834 = vld [vmem:[#allocation5 + $0x328] sm:$0xff]
    %v835 = vld [vmem:[#allocation5 + $0x330] sm:$0xff]
    %v836 = vld [vmem:[#allocation5 + $0x338] sm:$0xff]
    %v837 = vld [vmem:[#allocation5 + $0x340] sm:$0xff]
    %v838 = vld [vmem:[#allocation5 + $0x348] sm:$0xff]
    %v839 = vld [vmem:[#allocation5 + $0x350] sm:$0xff]
    %v840 = vld [vmem:[#allocation5 + $0x358] sm:$0xff]
    %v841 = vld [vmem:[#allocation5 + $0x360] sm:$0xff]
    %v842 = vld [vmem:[#allocation5 + $0x368] sm:$0xff]
    %v843 = vld [vmem:[#allocation5 + $0x370] sm:$0xff]
    %v844 = vld [vmem:[#allocation5 + $0x378] sm:$0xff]
    %v845 = vld [vmem:[#allocation5 + $0x380] sm:$0xff]
    %v846 = vld [vmem:[#allocation5 + $0x388] sm:$0xff]
    %v847 = vld [vmem:[#allocation5 + $0x390] sm:$0xff]
    %v848 = vld [vmem:[#allocation5 + $0x398] sm:$0xff]
    %v849 = vld [vmem:[#allocation5 + $0x3a0] sm:$0xff]
    %v850 = vld [vmem:[#allocation5 + $0x3a8] sm:$0xff]
    %v851 = vld [vmem:[#allocation5 + $0x3b0] sm:$0xff]
    %v852 = vld [vmem:[#allocation5 + $0x3b8] sm:$0xff]
    %v853 = vld [vmem:[#allocation5 + $0x3c0] sm:$0xff]
    %v854 = vld [vmem:[#allocation5 + $0x3c8] sm:$0xff]
    %v855 = vld [vmem:[#allocation5 + $0x3d0] sm:$0xff]
    %v856 = vld [vmem:[#allocation5 + $0x3d8] sm:$0xff]
    %v857 = vld [vmem:[#allocation5 + $0x3e0] sm:$0xff]
    %v858 = vld [vmem:[#allocation5 + $0x3e8] sm:$0xff]
    %v859 = vld [vmem:[#allocation5 + $0x3f0] sm:$0xff]
    %v860 = vld [vmem:[#allocation5 + $0x3f8] sm:$0xff]
    %s861 = scalar_lea.vmem [#allocation10], 6
    %v862 = vld [vmem:[%s861] ss:$8 sm:$0x3]
    %v864 = vlaneseq
    %v865 = vshrl.u32 %v864, 7
    %v866 = vsub.s32 0, %v865
    %v867 = vrot.slane %v862, %v866
    %v868 = vlaneseq
    %v869 = vshrl.u32 %v868, 7
    %v870 = vsub.s32 1, %v869
    %v871 = vrot.slane %v862, %v870
    %v906 = vunpack.c.l.b16 %v829
    %v907 = vunpack.c.h.b16 %v829
    %v908 = vunpack.c.l.b16 %v830
    %v909 = vunpack.c.h.b16 %v830
    %v910 = vunpack.c.l.b16 %v831
    %v911 = vunpack.c.h.b16 %v831
    %v912 = vunpack.c.l.b16 %v832
    %v913 = vunpack.c.h.b16 %v832
    %v914 = vunpack.c.l.b16 %v833
    %v915 = vunpack.c.h.b16 %v833
    %v916 = vunpack.c.l.b16 %v834
    %v917 = vunpack.c.h.b16 %v834
    %v918 = vunpack.c.l.b16 %v835
    %v919 = vunpack.c.h.b16 %v835
    %v920 = vunpack.c.l.b16 %v836
    %v921 = vunpack.c.h.b16 %v836
    %v922 = vunpack.c.l.b16 %v837
    %v923 = vunpack.c.h.b16 %v837
    %v924 = vunpack.c.l.b16 %v838
    %v925 = vunpack.c.h.b16 %v838
    %v926 = vunpack.c.l.b16 %v839
    %v927 = vunpack.c.h.b16 %v839
    %v928 = vunpack.c.l.b16 %v840
    %v929 = vunpack.c.h.b16 %v840
    %v930 = vunpack.c.l.b16 %v841
    %v931 = vunpack.c.h.b16 %v841
    %v932 = vunpack.c.l.b16 %v842
    %v933 = vunpack.c.h.b16 %v842
    %v934 = vunpack.c.l.b16 %v843
    %v935 = vunpack.c.h.b16 %v843
    %v936 = vunpack.c.l.b16 %v844
    %v937 = vunpack.c.h.b16 %v844
    %v938 = vunpack.c.l.b16 %v845
    %v939 = vunpack.c.h.b16 %v845
    %v940 = vunpack.c.l.b16 %v846
    %v941 = vunpack.c.h.b16 %v846
    %v942 = vunpack.c.l.b16 %v847
    %v943 = vunpack.c.h.b16 %v847
    %v944 = vunpack.c.l.b16 %v848
    %v945 = vunpack.c.h.b16 %v848
    %v946 = vunpack.c.l.b16 %v849
    %v947 = vunpack.c.h.b16 %v849
    %v948 = vunpack.c.l.b16 %v850
    %v949 = vunpack.c.h.b16 %v850
    %v950 = vunpack.c.l.b16 %v851
    %v951 = vunpack.c.h.b16 %v851
    %v952 = vunpack.c.l.b16 %v852
    %v953 = vunpack.c.h.b16 %v852
    %v954 = vunpack.c.l.b16 %v853
    %v955 = vunpack.c.h.b16 %v853
    %v956 = vunpack.c.l.b16 %v854
    %v957 = vunpack.c.h.b16 %v854
    %v958 = vunpack.c.l.b16 %v855
    %v959 = vunpack.c.h.b16 %v855
    %v960 = vunpack.c.l.b16 %v856
    %v961 = vunpack.c.h.b16 %v856
    %v962 = vunpack.c.l.b16 %v857
    %v963 = vunpack.c.h.b16 %v857
    %v964 = vunpack.c.l.b16 %v858
    %v965 = vunpack.c.h.b16 %v858
    %v966 = vunpack.c.l.b16 %v859
    %v967 = vunpack.c.h.b16 %v859
    %v968 = vunpack.c.l.b16 %v860
    %v969 = vunpack.c.h.b16 %v860
    %v970 = vpack.c.b16 %v908, %v906
    %v971 = vpack.c.b16 %v909, %v907
    %v972 = vpack.c.b16 %v912, %v910
    %v973 = vpack.c.b16 %v913, %v911
    %v974 = vpack.c.b16 %v916, %v914
    %v975 = vpack.c.b16 %v917, %v915
    %v976 = vpack.c.b16 %v920, %v918
    %v977 = vpack.c.b16 %v921, %v919
    %v978 = vpack.c.b16 %v924, %v922
    %v979 = vpack.c.b16 %v925, %v923
    %v980 = vpack.c.b16 %v928, %v926
    %v981 = vpack.c.b16 %v929, %v927
    %v982 = vpack.c.b16 %v932, %v930
    %v983 = vpack.c.b16 %v933, %v931
    %v984 = vpack.c.b16 %v936, %v934
    %v985 = vpack.c.b16 %v937, %v935
    %v986 = vpack.c.b16 %v940, %v938
    %v987 = vpack.c.b16 %v941, %v939
    %v988 = vpack.c.b16 %v944, %v942
    %v989 = vpack.c.b16 %v945, %v943
    %v990 = vpack.c.b16 %v948, %v946
    %v991 = vpack.c.b16 %v949, %v947
    %v992 = vpack.c.b16 %v952, %v950
    %v993 = vpack.c.b16 %v953, %v951
    %v994 = vpack.c.b16 %v956, %v954
    %v995 = vpack.c.b16 %v957, %v955
    %v996 = vpack.c.b16 %v960, %v958
    %v997 = vpack.c.b16 %v961, %v959
    %v998 = vpack.c.b16 %v964, %v962
    %v999 = vpack.c.b16 %v965, %v963
    %v1000 = vpack.c.b16 %v968, %v966
    %v1001 = vpack.c.b16 %v969, %v967
    %1034 = vmatprep.subr.bf16.mxu0 %v985
    %1035 = vmatpush1.bf16.msra.mxu0 %v984
    %1036 = vmatprep.subr.bf16.mxu0 %v983
    %1037 = vmatpush1.bf16.msra.mxu0 %v982
    %1038 = vmatprep.subr.bf16.mxu0 %v981
    %1039 = vmatpush1.bf16.msra.mxu0 %v980
    %1040 = vmatprep.subr.bf16.mxu0 %v979
    %1041 = vmatpush1.bf16.msra.mxu0 %v978
    %1042 = vmatprep.subr.bf16.mxu0 %v977
    %1043 = vmatpush1.bf16.msra.mxu0 %v976
    %1044 = vmatprep.subr.bf16.mxu0 %v975
    %1045 = vmatpush1.bf16.msra.mxu0 %v974
    %1046 = vmatprep.subr.bf16.mxu0 %v973
    %1047 = vmatpush1.bf16.msra.mxu0 %v972
    %1048 = vmatprep.subr.bf16.mxu0 %v971
    %1049 = vmatpush1.bf16.msra.mxu0 %v970
    %1050 = vmatprep.subr.bf16.mxu0 %v1001
    %1051 = vmatpush2.bf16.msra.mxu0 %v1000
    %1052 = vmatprep.subr.bf16.mxu0 %v999
    %1053 = vmatpush2.bf16.msra.mxu0 %v998
    %1054 = vmatprep.subr.bf16.mxu0 %v997
    %1055 = vmatpush2.bf16.msra.mxu0 %v996
    %1056 = vmatprep.subr.bf16.mxu0 %v995
    %1057 = vmatpush2.bf16.msra.mxu0 %v994
    %1058 = vmatprep.subr.bf16.mxu0 %v993
    %1059 = vmatpush2.bf16.msra.mxu0 %v992
    %1060 = vmatprep.subr.bf16.mxu0 %v991
    %1061 = vmatpush2.bf16.msra.mxu0 %v990
    %1062 = vmatprep.subr.bf16.mxu0 %v989
    %1063 = vmatpush2.bf16.msra.mxu0 %v988
    %1064 = vmatprep.subr.bf16.mxu0 %v987
    %1065 = vmatpush2.bf16.msra.mxu0 %v986
    %1066 = vmatprep.mubr.bf16.mxu0 %v828
    %1067 = vmatmul.mubr.bf16.gmra.mxu0 %v827
    %v1068 = vpop.f32.mrf.mxu0
    %v1069 = vadd.f32 %v867, %v1068
    %v1070 = vpop.f32.mrf.mxu0
    %v1071 = vadd.f32 %v871, %v1070
    %v1072 = vpop.f32.mrf.mxu0
    %v1073 = vpop.f32.mrf.mxu0
    %1074 = vdwg.mxu0
    %v1075 = vpack.c.bf16 %v1069, %v1069
    %v1076 = vpack.c.bf16 %v1071, %v1071
    %v1077 = vxor.u32 %v1076, 2147516416
    %v1079 = vmul.bf16 %v1077, 1069105081
    %v1080 = vpow.bf16.pop %v1079
    %v1081 = vadd.bf16 %v1080, 1065369472
    %v1082 = vrcp.bf16.pop %v1081
    %v1083 = vmul.bf16 1065369472, %v1082
    %v1084 = vmul.bf16 %v1075, %v1083
    %v1085 = vunpack.c.l.bf16 %v1084
    %1086 = vst [vmem:[#allocation11] sm:$0xff] %v1085
    // Predicated region
    $region42: #{tpu_custom_call.1} parent=1 // pred_check
      _
    $region43: #{tpu_custom_call.1} parent=1 // pred_check_branch
      %1088 = sbr.rel (0) target = $region45
    $region44: #{tpu_custom_call.1} parent=1 // pred_region
      %s1090 = ssub.s32 128, 128
      %1091 = vsyncadd [#allocation4], %s1090
      %s1093 = sshll.u32 [#allocation11], 4
      %s1094 = int_to_ptr.vmem [resolvable:$true] %s1093
      %1096 = dma.vmem_to_hbm [thread:$0]  %s1094, 128, %s5, [#allocation4]
    $region45: #{tpu_custom_call.1} parent=1 // pred_fallthru
      _
    // Predicated region
    $region46: #{tpu_custom_call.1} parent=1 // pred_check
      _
    $region47: #{tpu_custom_call.1} parent=1 // pred_check_branch
      %1098 = sbr.rel (0) target = $region49
    $region48: #{tpu_custom_call.1} parent=1 // pred_region
      %1099 = dma.done [#allocation4], 128
    $region49: #{tpu_custom_call.1} parent=1 // pred_fallthru
      _
    %1100 = vsyncpa [#allocation3], 1
    %1101 = vsyncpa [#allocation6], 1
    %1102 = vsyncpa [#allocation9], 1
    %1103 = vsyncpa [#allocation4], 1

</llo_original>
